<compile_context>
chip_gen: v7x
topology: tpu7x:2x2x1
jax: 0.10.0
libtpu: 0.0.40
codegen_flags: <defaults>
</compile_context>

<pallas_src>
import jax
import jax.numpy as jnp
from jax.experimental import pallas as pl
from jax.experimental.pallas import tpu as pltpu

MAX_ACTION = 90.0
LANE = 128
SUBLANE = 8
H1, H2 = 400, 300  # original hidden sizes (padded to 512 / 384 inside)


def _round_up(x, m):
    return ((x + m - 1) // m) * m


def actor_kernel(x_ref, w1_ref, b1_ref, w2_ref, b2_ref, w3_ref, b3_ref, o_ref):
    # layer 1: Linear(state_dim_p, 512) + ReLU   (MXU, f32 accumulate)
    h1 = jnp.dot(x_ref[...], w1_ref[...], preferred_element_type=jnp.float32)
    h1 = jnp.maximum(h1 + b1_ref[...], 0.0)
    # layer 2: Linear(512, 384) + ReLU
    h2 = jnp.dot(h1, w2_ref[...], preferred_element_type=jnp.float32)
    h2 = jnp.maximum(h2 + b2_ref[...], 0.0)
    # layer 3: Linear(384, action_dim_p), then max_action * tanh (EUP)
    h3 = jnp.dot(h2, w3_ref[...], preferred_element_type=jnp.float32)
    o_ref[...] = MAX_ACTION * jnp.tanh(h3 + b3_ref[...])


def init_actor_params(key, state_dim, action_dim):
    """PyTorch-style uniform(-1/sqrt(fan_in), +1/sqrt(fan_in)) init.
    Weights stored as (in_features, out_features); unpadded logical shapes."""
    def linear(key, fan_in, fan_out):
        kw, kb = jax.random.split(key)
        bound = 1.0 / jnp.sqrt(jnp.float32(fan_in))
        w = jax.random.uniform(kw, (fan_in, fan_out), jnp.float32, -bound, bound)
        b = jax.random.uniform(kb, (1, fan_out), jnp.float32, -bound, bound)
        return w, b

    k1, k2, k3 = jax.random.split(key, 3)
    w1, b1 = linear(k1, state_dim, H1)
    w2, b2 = linear(k2, H1, H2)
    w3, b3 = linear(k3, H2, action_dim)
    return (w1, b1, w2, b2, w3, b3)


def pad_actor_params(params):
    """Zero-pad all weight/bias dims to lane (128) multiples.
    Padding is exact: padded inputs/rows are zero, padded bias entries are
    zero, so padded hidden units stay exactly 0 through ReLU."""
    def pad2(a, rows, cols):
        out = jnp.zeros((rows, cols), a.dtype)
        return out.at[: a.shape[0], : a.shape[1]].set(a)

    w1, b1, w2, b2, w3, b3 = params
    sd_p = _round_up(w1.shape[0], LANE)
    h1_p = _round_up(w1.shape[1], LANE)
    h2_p = _round_up(w2.shape[1], LANE)
    ad_p = _round_up(w3.shape[1], LANE)
    return (
        pad2(w1, sd_p, h1_p), pad2(b1, 1, h1_p),
        pad2(w2, h1_p, h2_p), pad2(b2, 1, h2_p),
        pad2(w3, h2_p, ad_p), pad2(b3, 1, ad_p),
    )


def actor_forward(x, padded_params, action_dim, *, tb_max=256):
    """x: (batch, state_dim) float32. Returns (batch, action_dim) float32."""
    w1, b1, w2, b2, w3, b3 = padded_params
    batch, state_dim = x.shape
    sd_p = w1.shape[0]
    ad_p = w3.shape[1]

    # Batch tile: multiple of 8 sublanes, capped at tb_max rows; pad the batch
    # up to a whole number of tiles so every grid step sees a full tile.
    tb = min(tb_max, _round_up(batch, SUBLANE))
    batch_p = _round_up(batch, tb)

    x_p = jnp.zeros((batch_p, sd_p), jnp.float32)
    x_p = x_p.at[:batch, :state_dim].set(x.astype(jnp.float32))

    grid = (batch_p // tb,)

    out_p = pl.pallas_call(
        actor_kernel,
        out_shape=jax.ShapeDtypeStruct((batch_p, ad_p), jnp.float32),
        grid_spec=pltpu.PrefetchScalarGridSpec(
            num_scalar_prefetch=0,
            grid=grid,
            in_specs=[
                # batch tile of x, pipelined along the grid
                pl.BlockSpec((tb, sd_p), lambda i: (i, 0)),
                # weights/biases: constant index_map -> DMA'd once, resident
                pl.BlockSpec(w1.shape, lambda i: (0, 0)),
                pl.BlockSpec(b1.shape, lambda i: (0, 0)),
                pl.BlockSpec(w2.shape, lambda i: (0, 0)),
                pl.BlockSpec(b2.shape, lambda i: (0, 0)),
                pl.BlockSpec(w3.shape, lambda i: (0, 0)),
                pl.BlockSpec(b3.shape, lambda i: (0, 0)),
            ],
            out_specs=pl.BlockSpec((tb, ad_p), lambda i: (i, 0)),
        ),
        compiler_params=pltpu.CompilerParams(
            dimension_semantics=("parallel",),
        ),
    )(x_p, w1, b1, w2, b2, w3, b3)

    # Slice away batch padding and lane padding of the action dim.
    return out_p[:batch, :action_dim]


def actor_ref(x, params):
    """Pure-JAX reference on the unpadded parameters."""
    w1, b1, w2, b2, w3, b3 = params
    h = jnp.maximum(x @ w1 + b1, 0.0)
    h = jnp.maximum(h @ w2 + b2, 0.0)
    return MAX_ACTION * jnp.tanh(h @ w3 + b3)


if __name__ == "__main__":
    key = jax.random.PRNGKey(0)
    k_params, k_x1, k_x2 = jax.random.split(key, 3)

    # KivyCar TD3: small state / action dims.
    state_dim, action_dim = 5, 1
    params = init_actor_params(k_params, state_dim, action_dim)
    padded = pad_actor_params(params)

    # Case 1: tiny inference batch (single grid step).
    x1 = jax.random.normal(k_x1, (2, state_dim), jnp.float32)
    out1 = jax.block_until_ready(actor_forward(x1, padded, action_dim))
    ref1 = actor_ref(x1, params)
    assert out1.shape == (2, action_dim)
    assert jnp.allclose(out1, ref1, atol=1e-4, rtol=1e-4)

    # Case 2: larger, non-aligned batch to exercise the grid + batch padding.
    x2 = jax.random.normal(k_x2, (200, state_dim), jnp.float32)
    out2 = jax.block_until_ready(actor_forward(x2, padded, action_dim, tb_max=64))
    ref2 = actor_ref(x2, params)
    assert out2.shape == (200, action_dim)
    assert jnp.allclose(out2, ref2, atol=1e-4, rtol=1e-4)

    print("KERNEL_OK")
</pallas_src>

<mosaic_0001>
module attributes {stable_mosaic.version = 11 : i64} {
  func.func @actor_kernel(%arg0: i32, %arg1: memref<8x128xf32, #tpu.memory_space<vmem>>, %arg2: memref<128x512xf32, #tpu.memory_space<vmem>>, %arg3: memref<1x512xf32, #tpu.memory_space<vmem>>, %arg4: memref<512x384xf32, #tpu.memory_space<vmem>>, %arg5: memref<1x384xf32, #tpu.memory_space<vmem>>, %arg6: memref<384x128xf32, #tpu.memory_space<vmem>>, %arg7: memref<1x128xf32, #tpu.memory_space<vmem>>, %arg8: memref<8x128xf32, #tpu.memory_space<vmem>>) attributes {dimension_semantics = [#tpu.dimension_semantics<parallel>], iteration_bounds = array<i64: 1>, scalar_prefetch = 0 : i64, scratch_operands = 0 : i64, tpu.core_type = #tpu.core_type<tc>, window_params = [{transform_indices = @transform_0, window_bounds = array<i64: 8, 128>}, {pipeline_mode = #tpu.pipeline_mode<synchronous>, transform_indices = @transform_1, window_bounds = array<i64: 128, 512>}, {pipeline_mode = #tpu.pipeline_mode<synchronous>, transform_indices = @transform_2, window_bounds = array<i64: 1, 512>}, {pipeline_mode = #tpu.pipeline_mode<synchronous>, transform_indices = @transform_3, window_bounds = array<i64: 512, 384>}, {pipeline_mode = #tpu.pipeline_mode<synchronous>, transform_indices = @transform_4, window_bounds = array<i64: 1, 384>}, {pipeline_mode = #tpu.pipeline_mode<synchronous>, transform_indices = @transform_5, window_bounds = array<i64: 384, 128>}, {pipeline_mode = #tpu.pipeline_mode<synchronous>, transform_indices = @transform_6, window_bounds = array<i64: 1, 128>}, {transform_indices = @transform_7, window_bounds = array<i64: 8, 128>}]} {
    %c0 = arith.constant 0 : index
    %c0_0 = arith.constant 0 : index
    %0 = vector.load %arg1[%c0, %c0_0] : memref<8x128xf32, #tpu.memory_space<vmem>>, vector<8x128xf32>
    %c0_1 = arith.constant 0 : index
    %c0_2 = arith.constant 0 : index
    %1 = vector.load %arg2[%c0_1, %c0_2] : memref<128x512xf32, #tpu.memory_space<vmem>>, vector<128x512xf32>
    %cst = arith.constant dense<0.000000e+00> : vector<8x512xf32>
    %2 = tpu.matmul %0, %1, %cst {dimension_numbers = #tpu.dot_dimension_numbers<[1], [0], [0], [1], [0, 0, 1, 1], [], []>} : vector<8x128xf32>, vector<128x512xf32>, vector<8x512xf32> -> vector<8x512xf32>
    %c0_3 = arith.constant 0 : index
    %c0_4 = arith.constant 0 : index
    %3 = vector.load %arg3[%c0_3, %c0_4] : memref<1x512xf32, #tpu.memory_space<vmem>>, vector<1x512xf32>
    %4 = vector.broadcast %3 : vector<1x512xf32> to vector<8x512xf32>
    %5 = arith.addf %2, %4 : vector<8x512xf32>
    %cst_5 = arith.constant 0.000000e+00 : f32
    %6 = vector.broadcast %cst_5 : f32 to vector<8x512xf32>
    %7 = arith.maximumf %5, %6 : vector<8x512xf32>
    %c0_6 = arith.constant 0 : index
    %c0_7 = arith.constant 0 : index
    %8 = vector.load %arg4[%c0_6, %c0_7] : memref<512x384xf32, #tpu.memory_space<vmem>>, vector<512x384xf32>
    %cst_8 = arith.constant dense<0.000000e+00> : vector<8x384xf32>
    %9 = tpu.matmul %7, %8, %cst_8 {dimension_numbers = #tpu.dot_dimension_numbers<[1], [0], [0], [1], [0, 0, 1, 1], [], []>} : vector<8x512xf32>, vector<512x384xf32>, vector<8x384xf32> -> vector<8x384xf32>
    %c0_9 = arith.constant 0 : index
    %c0_10 = arith.constant 0 : index
    %10 = vector.load %arg5[%c0_9, %c0_10] : memref<1x384xf32, #tpu.memory_space<vmem>>, vector<1x384xf32>
    %11 = vector.broadcast %10 : vector<1x384xf32> to vector<8x384xf32>
    %12 = arith.addf %9, %11 : vector<8x384xf32>
    %cst_11 = arith.constant 0.000000e+00 : f32
    %13 = vector.broadcast %cst_11 : f32 to vector<8x384xf32>
    %14 = arith.maximumf %12, %13 : vector<8x384xf32>
    %c0_12 = arith.constant 0 : index
    %c0_13 = arith.constant 0 : index
    %15 = vector.load %arg6[%c0_12, %c0_13] : memref<384x128xf32, #tpu.memory_space<vmem>>, vector<384x128xf32>
    %cst_14 = arith.constant dense<0.000000e+00> : vector<8x128xf32>
    %16 = tpu.matmul %14, %15, %cst_14 {dimension_numbers = #tpu.dot_dimension_numbers<[1], [0], [0], [1], [0, 0, 1, 1], [], []>} : vector<8x384xf32>, vector<384x128xf32>, vector<8x128xf32> -> vector<8x128xf32>
    %c0_15 = arith.constant 0 : index
    %c0_16 = arith.constant 0 : index
    %17 = vector.load %arg7[%c0_15, %c0_16] : memref<1x128xf32, #tpu.memory_space<vmem>>, vector<1x128xf32>
    %18 = vector.broadcast %17 : vector<1x128xf32> to vector<8x128xf32>
    %19 = arith.addf %16, %18 : vector<8x128xf32>
    %20 = math.tanh %19 : vector<8x128xf32>
    %cst_17 = arith.constant 9.000000e+01 : f32
    %21 = vector.broadcast %cst_17 : f32 to vector<8x128xf32>
    %22 = arith.mulf %21, %20 : vector<8x128xf32>
    %c0_18 = arith.constant 0 : index
    %c0_19 = arith.constant 0 : index
    %23 = vector.load %arg8[%c0_18, %c0_19] : memref<8x128xf32, #tpu.memory_space<vmem>>, vector<8x128xf32>
    tpu.vector_store %arg8[%c0_18, %c0_19], %22 {strides = array<i32>} : memref<8x128xf32, #tpu.memory_space<vmem>>, vector<8x128xf32>,
    return
  }
  func.func @transform_0(%arg0: i32) -> (i32, i32) {
    %c0_i32 = arith.constant 0 : i32
    %c0_i32_0 = arith.constant 0 : i32
    return %arg0, %c0_i32 : i32, i32
  }
  func.func @transform_1(%arg0: i32) -> (i32, i32) {
    %c0_i32 = arith.constant 0 : i32
    %c0_i32_0 = arith.constant 0 : i32
    %c0_i32_1 = arith.constant 0 : i32
    return %c0_i32, %c0_i32_0 : i32, i32
  }
  func.func @transform_2(%arg0: i32) -> (i32, i32) {
    %c0_i32 = arith.constant 0 : i32
    %c0_i32_0 = arith.constant 0 : i32
    %c0_i32_1 = arith.constant 0 : i32
    return %c0_i32, %c0_i32_0 : i32, i32
  }
  func.func @transform_3(%arg0: i32) -> (i32, i32) {
    %c0_i32 = arith.constant 0 : i32
    %c0_i32_0 = arith.constant 0 : i32
    %c0_i32_1 = arith.constant 0 : i32
    return %c0_i32, %c0_i32_0 : i32, i32
  }
  func.func @transform_4(%arg0: i32) -> (i32, i32) {
    %c0_i32 = arith.constant 0 : i32
    %c0_i32_0 = arith.constant 0 : i32
    %c0_i32_1 = arith.constant 0 : i32
    return %c0_i32, %c0_i32_0 : i32, i32
  }
  func.func @transform_5(%arg0: i32) -> (i32, i32) {
    %c0_i32 = arith.constant 0 : i32
    %c0_i32_0 = arith.constant 0 : i32
    %c0_i32_1 = arith.constant 0 : i32
    return %c0_i32, %c0_i32_0 : i32, i32
  }
  func.func @transform_6(%arg0: i32) -> (i32, i32) {
    %c0_i32 = arith.constant 0 : i32
    %c0_i32_0 = arith.constant 0 : i32
    %c0_i32_1 = arith.constant 0 : i32
    return %c0_i32, %c0_i32_0 : i32, i32
  }
  func.func @transform_7(%arg0: i32) -> (i32, i32) {
    %c0_i32 = arith.constant 0 : i32
    %c0_i32_0 = arith.constant 0 : i32
    return %arg0, %c0_i32 : i32, i32
  }
}

</mosaic_0001>

<llo_original>
// kernel: tpu_custom_call.1
$region0: #{tpu_custom_call.1}
  #allocation0 [shape = 'u32[]', space=smem, size = 0x4, offset = 0x4, fixed_abs, tag = 'smem constant byte address 0x4 - core index']
  #allocation1 [shape = 'u32[144,128]{1,0:T(1,128)}', space=vmem, size = 0x12000, scoped, tag = 'internal scratch']
  %s0 = inlined_call_operand.hbm [shape: f32[8,128], index: 0, kind: input, shape index: {}]
  %s1 = inlined_call_operand.hbm [shape: f32[128,512], index: 1, kind: input, shape index: {}]
  %s2 = inlined_call_operand.vmem [shape: f32[1,512], index: 2, kind: input, shape index: {}]
  %s3 = inlined_call_operand.hbm [shape: f32[512,384], index: 3, kind: input, shape index: {}]
  %s4 = inlined_call_operand.vmem [shape: f32[1,384], index: 4, kind: input, shape index: {}]
  %s5 = inlined_call_operand.hbm [shape: f32[384,128], index: 5, kind: input, shape index: {}]
  %s6 = inlined_call_operand.vmem [shape: f32[1,128], index: 6, kind: input, shape index: {}]
  %s7 = inlined_call_operand.hbm [shape: f32[8,128], index: 7, kind: output, shape index: {}]
  %s8 = sld [smem:[#allocation0]]
  $region54: #{tpu_custom_call.1} parent=0
    _
  %s10 = ssub.s32 1, %s8
  %s11 = scalar_select 0, %s10, %s8
  $region1: #{tpu_custom_call.1} parent=0
    #allocation2 [shape = 'u8[4096]{0}', space=vmem, size = 0x1000, scoped, tag = 'input window, operand 0, single buffered']
    #allocation3 [shape = 's32[1]{0}', space=sflag, size = 0x4, scoped, tag = 'scoped memory for tpu_custom_call.1']
    #allocation4 [shape = 's32[1]{0}', space=sflag, size = 0x4, scoped, tag = 'scoped memory for tpu_custom_call.1']
    #allocation5 [shape = 'u8[262144]{0}', space=vmem, size = 0x40000, scoped, tag = 'input window, operand 1, single buffered']
    #allocation6 [shape = 's32[1]{0}', space=sflag, size = 0x4, scoped, tag = 'scoped memory for tpu_custom_call.1']
    #allocation7 [shape = 'u8[786432]{0}', space=vmem, size = 0xc0000, scoped, tag = 'input window, operand 3, single buffered']
    #allocation8 [shape = 'u8[196608]{0}', space=vmem, size = 0x30000, scoped, tag = 'input window, operand 5, single buffered']
    #allocation9 [shape = 's32[1]{0}', space=sflag, size = 0x4, scoped, tag = 'scoped memory for tpu_custom_call.1']
    #allocation10 [shape = 'u8[4096]{0}', space=vmem, size = 0x1000, scoped, tag = 'output window, operand 0, single buffered']
    %12 = vsyncpa [#allocation3], 0
    %13 = vsyncpa [#allocation6], 0
    %14 = vsyncpa [#allocation9], 0
    %15 = vsyncpa [#allocation4], 0
    // Predicated region
    $region2: #{tpu_custom_call.1} parent=1 // pred_check
      _
    $region3: #{tpu_custom_call.1} parent=1 // pred_check_branch
      %17 = sbr.rel (0) target = $region5
    $region4: #{tpu_custom_call.1} parent=1 // pred_region
      %s19 = ssub.s32 128, 128
      %20 = vsyncadd [#allocation3], %s19
      %s22 = sshll.u32 [#allocation2], 4
      %s23 = int_to_ptr.vmem [resolvable:$true] %s22
      %25 = dma.hbm_to_vmem [thread:$0]  %s0, 128, %s23, [#allocation3]
    $region5: #{tpu_custom_call.1} parent=1 // pred_fallthru
      _
    // Predicated region
    $region6: #{tpu_custom_call.1} parent=1 // pred_check
      _
    $region7: #{tpu_custom_call.1} parent=1 // pred_check_branch
      %27 = sbr.rel (0) target = $region9
    $region8: #{tpu_custom_call.1} parent=1 // pred_region
      %s29 = ssub.s32 8192, 8192
      %30 = vsyncadd [#allocation6], %s29
      %s31 = sshll.u32 [#allocation5], 4
      %s32 = int_to_ptr.vmem [resolvable:$true] %s31
      %37 = dma.hbm_to_vmem [thread:$0]  %s1, 8192, %s32, [#allocation6], 512, 512, 32
    $region9: #{tpu_custom_call.1} parent=1 // pred_fallthru
      _
    // Predicated region
    $region10: #{tpu_custom_call.1} parent=1 // pred_check
      _
    $region11: #{tpu_custom_call.1} parent=1 // pred_check_branch
      %39 = sbr.rel (0) target = $region13
    $region12: #{tpu_custom_call.1} parent=1 // pred_region
      _
    $region13: #{tpu_custom_call.1} parent=1 // pred_fallthru
      _
    // Predicated region
    $region14: #{tpu_custom_call.1} parent=1 // pred_check
      _
    $region15: #{tpu_custom_call.1} parent=1 // pred_check_branch
      %41 = sbr.rel (0) target = $region17
    $region16: #{tpu_custom_call.1} parent=1 // pred_region
      %s43 = ssub.s32 24576, 24576
      %44 = vsyncadd [#allocation6], %s43
      %s45 = sshll.u32 [#allocation7], 4
      %s46 = int_to_ptr.vmem [resolvable:$true] %s45
      %51 = dma.hbm_to_vmem [thread:$0]  %s3, 24576, %s46, [#allocation6], 384, 384, 24
    $region17: #{tpu_custom_call.1} parent=1 // pred_fallthru
      _
    // Predicated region
    $region18: #{tpu_custom_call.1} parent=1 // pred_check
      _
    $region19: #{tpu_custom_call.1} parent=1 // pred_check_branch
      %53 = sbr.rel (0) target = $region21
    $region20: #{tpu_custom_call.1} parent=1 // pred_region
      _
    $region21: #{tpu_custom_call.1} parent=1 // pred_fallthru
      _
    // Predicated region
    $region22: #{tpu_custom_call.1} parent=1 // pred_check
      _
    $region23: #{tpu_custom_call.1} parent=1 // pred_check_branch
      %55 = sbr.rel (0) target = $region25
    $region24: #{tpu_custom_call.1} parent=1 // pred_region
      %s57 = ssub.s32 6144, 6144
      %58 = vsyncadd [#allocation9], %s57
      %s59 = sshll.u32 [#allocation8], 4
      %s60 = int_to_ptr.vmem [resolvable:$true] %s59
      %65 = dma.hbm_to_vmem [thread:$0]  %s5, 6144, %s60, [#allocation9], 128, 128, 8
    $region25: #{tpu_custom_call.1} parent=1 // pred_fallthru
      _
    // Predicated region
    $region26: #{tpu_custom_call.1} parent=1 // pred_check
      _
    $region27: #{tpu_custom_call.1} parent=1 // pred_check_branch
      %67 = sbr.rel (0) target = $region29
    $region28: #{tpu_custom_call.1} parent=1 // pred_region
      _
    $region29: #{tpu_custom_call.1} parent=1 // pred_fallthru
      _
    // Predicated region
    $region30: #{tpu_custom_call.1} parent=1 // pred_check
      _
    $region31: #{tpu_custom_call.1} parent=1 // pred_check_branch
      %69 = sbr.rel (0) target = $region33
    $region32: #{tpu_custom_call.1} parent=1 // pred_region
      %70 = dma.done [#allocation3], 128
    $region33: #{tpu_custom_call.1} parent=1 // pred_fallthru
      _
    // Predicated region
    $region34: #{tpu_custom_call.1} parent=1 // pred_check
      _
    $region35: #{tpu_custom_call.1} parent=1 // pred_check_branch
      %72 = sbr.rel (0) target = $region37
    $region36: #{tpu_custom_call.1} parent=1 // pred_region
      %73 = dma.done [#allocation6], 8192
    $region37: #{tpu_custom_call.1} parent=1 // pred_fallthru
      _
    // Predicated region
    $region38: #{tpu_custom_call.1} parent=1 // pred_check
      _
    $region39: #{tpu_custom_call.1} parent=1 // pred_check_branch
      %75 = sbr.rel (0) target = $region41
    $region40: #{tpu_custom_call.1} parent=1 // pred_region
      %76 = dma.done [#allocation6], 24576
    $region41: #{tpu_custom_call.1} parent=1 // pred_fallthru
      _
    // Predicated region
    $region42: #{tpu_custom_call.1} parent=1 // pred_check
      _
    $region43: #{tpu_custom_call.1} parent=1 // pred_check_branch
      %78 = sbr.rel (0) target = $region45
    $region44: #{tpu_custom_call.1} parent=1 // pred_region
      %79 = dma.done [#allocation9], 6144
    $region45: #{tpu_custom_call.1} parent=1 // pred_fallthru
      _
    %v80 = vld [vmem:[#allocation2] sm:$0xff]
    %v81 = vld [vmem:[#allocation5] sm:$0xff]
    %v82 = vld [vmem:[#allocation5 + $0x8] sm:$0xff]
    %v83 = vld [vmem:[#allocation5 + $0x10] sm:$0xff]
    %v84 = vld [vmem:[#allocation5 + $0x18] sm:$0xff]
    %v85 = vld [vmem:[#allocation5 + $0x20] sm:$0xff]
    %v86 = vld [vmem:[#allocation5 + $0x28] sm:$0xff]
    %v87 = vld [vmem:[#allocation5 + $0x30] sm:$0xff]
    %v88 = vld [vmem:[#allocation5 + $0x38] sm:$0xff]
    %v89 = vld [vmem:[#allocation5 + $0x40] sm:$0xff]
    %v90 = vld [vmem:[#allocation5 + $0x48] sm:$0xff]
    %v91 = vld [vmem:[#allocation5 + $0x50] sm:$0xff]
    %v92 = vld [vmem:[#allocation5 + $0x58] sm:$0xff]
    %v93 = vld [vmem:[#allocation5 + $0x60] sm:$0xff]
    %v94 = vld [vmem:[#allocation5 + $0x68] sm:$0xff]
    %v95 = vld [vmem:[#allocation5 + $0x70] sm:$0xff]
    %v96 = vld [vmem:[#allocation5 + $0x78] sm:$0xff]
    %v97 = vld [vmem:[#allocation5 + $0x80] sm:$0xff]
    %v98 = vld [vmem:[#allocation5 + $0x88] sm:$0xff]
    %v99 = vld [vmem:[#allocation5 + $0x90] sm:$0xff]
    %v100 = vld [vmem:[#allocation5 + $0x98] sm:$0xff]
    %v101 = vld [vmem:[#allocation5 + $0xa0] sm:$0xff]
    %v102 = vld [vmem:[#allocation5 + $0xa8] sm:$0xff]
    %v103 = vld [vmem:[#allocation5 + $0xb0] sm:$0xff]
    %v104 = vld [vmem:[#allocation5 + $0xb8] sm:$0xff]
    %v105 = vld [vmem:[#allocation5 + $0xc0] sm:$0xff]
    %v106 = vld [vmem:[#allocation5 + $0xc8] sm:$0xff]
    %v107 = vld [vmem:[#allocation5 + $0xd0] sm:$0xff]
    %v108 = vld [vmem:[#allocation5 + $0xd8] sm:$0xff]
    %v109 = vld [vmem:[#allocation5 + $0xe0] sm:$0xff]
    %v110 = vld [vmem:[#allocation5 + $0xe8] sm:$0xff]
    %v111 = vld [vmem:[#allocation5 + $0xf0] sm:$0xff]
    %v112 = vld [vmem:[#allocation5 + $0xf8] sm:$0xff]
    %v113 = vld [vmem:[#allocation5 + $0x100] sm:$0xff]
    %v114 = vld [vmem:[#allocation5 + $0x108] sm:$0xff]
    %v115 = vld [vmem:[#allocation5 + $0x110] sm:$0xff]
    %v116 = vld [vmem:[#allocation5 + $0x118] sm:$0xff]
    %v117 = vld [vmem:[#allocation5 + $0x120] sm:$0xff]
    %v118 = vld [vmem:[#allocation5 + $0x128] sm:$0xff]
    %v119 = vld [vmem:[#allocation5 + $0x130] sm:$0xff]
    %v120 = vld [vmem:[#allocation5 + $0x138] sm:$0xff]
    %v121 = vld [vmem:[#allocation5 + $0x140] sm:$0xff]
    %v122 = vld [vmem:[#allocation5 + $0x148] sm:$0xff]
    %v123 = vld [vmem:[#allocation5 + $0x150] sm:$0xff]
    %v124 = vld [vmem:[#allocation5 + $0x158] sm:$0xff]
    %v125 = vld [vmem:[#allocation5 + $0x160] sm:$0xff]
    %v126 = vld [vmem:[#allocation5 + $0x168] sm:$0xff]
    %v127 = vld [vmem:[#allocation5 + $0x170] sm:$0xff]
    %v128 = vld [vmem:[#allocation5 + $0x178] sm:$0xff]
    %v129 = vld [vmem:[#allocation5 + $0x180] sm:$0xff]
    %v130 = vld [vmem:[#allocation5 + $0x188] sm:$0xff]
    %v131 = vld [vmem:[#allocation5 + $0x190] sm:$0xff]
    %v132 = vld [vmem:[#allocation5 + $0x198] sm:$0xff]
    %v133 = vld [vmem:[#allocation5 + $0x1a0] sm:$0xff]
    %v134 = vld [vmem:[#allocation5 + $0x1a8] sm:$0xff]
    %v135 = vld [vmem:[#allocation5 + $0x1b0] sm:$0xff]
    %v136 = vld [vmem:[#allocation5 + $0x1b8] sm:$0xff]
    %v137 = vld [vmem:[#allocation5 + $0x1c0] sm:$0xff]
    %v138 = vld [vmem:[#allocation5 + $0x1c8] sm:$0xff]
    %v139 = vld [vmem:[#allocation5 + $0x1d0] sm:$0xff]
    %v140 = vld [vmem:[#allocation5 + $0x1d8] sm:$0xff]
    %v141 = vld [vmem:[#allocation5 + $0x1e0] sm:$0xff]
    %v142 = vld [vmem:[#allocation5 + $0x1e8] sm:$0xff]
    %v143 = vld [vmem:[#allocation5 + $0x1f0] sm:$0xff]
    %v144 = vld [vmem:[#allocation5 + $0x1f8] sm:$0xff]
    %v145 = vld [vmem:[%s2] sm:$0xf]
    %v147 = vlaneseq
    %v148 = vshrl.u32 %v147, 7
    %v149 = vsub.s32 0, %v148
    %v150 = vrot.slane %v145, %v149
    %v151 = vlaneseq
    %v152 = vshrl.u32 %v151, 7
    %v153 = vsub.s32 1, %v152
    %v154 = vrot.slane %v145, %v153
    %v155 = vlaneseq
    %v156 = vshrl.u32 %v155, 7
    %v157 = vsub.s32 2, %v156
    %v158 = vrot.slane %v145, %v157
    %v159 = vlaneseq
    %v160 = vshrl.u32 %v159, 7
    %v161 = vsub.s32 3, %v160
    %v162 = vrot.slane %v145, %v161
    %167 = vmatprep.subr.mxu0 %v82
    %168 = vmatpush1.msra.mxu0 %v81
    %169 = vmatprep.subr.mxu0 %v86
    %170 = vmatpush1.msra.mxu0 %v85
    %171 = vmatprep.subr.mxu0 %v90
    %172 = vmatpush1.msra.mxu0 %v89
    %173 = vmatprep.subr.mxu0 %v94
    %174 = vmatpush1.msra.mxu0 %v93
    %175 = vmatprep.subr.mxu0 %v98
    %176 = vmatpush1.msra.mxu0 %v97
    %177 = vmatprep.subr.mxu0 %v102
    %178 = vmatpush1.msra.mxu0 %v101
    %179 = vmatprep.subr.mxu0 %v106
    %180 = vmatpush1.msra.mxu0 %v105
    %181 = vmatprep.subr.mxu0 %v110
    %182 = vmatpush1.msra.mxu0 %v109
    %183 = vmatprep.subr.mxu0 %v114
    %184 = vmatpush1.msra.mxu0 %v113
    %185 = vmatprep.subr.mxu0 %v118
    %186 = vmatpush1.msra.mxu0 %v117
    %187 = vmatprep.subr.mxu0 %v122
    %188 = vmatpush1.msra.mxu0 %v121
    %189 = vmatprep.subr.mxu0 %v126
    %190 = vmatpush1.msra.mxu0 %v125
    %191 = vmatprep.subr.mxu0 %v130
    %192 = vmatpush1.msra.mxu0 %v129
    %193 = vmatprep.subr.mxu0 %v134
    %194 = vmatpush1.msra.mxu0 %v133
    %195 = vmatprep.subr.mxu0 %v138
    %196 = vmatpush1.msra.mxu0 %v137
    %197 = vmatprep.subr.mxu0 %v142
    %198 = vmatpush1.msra.mxu0 %v141
    %199 = vmatprep.subr.mxu0 0.0
    %200 = vmatpush1.msra.mxu0 0.0
    %201 = vmatprep.subr.mxu0 0.0
    %202 = vmatpush1.msra.mxu0 0.0
    %203 = vmatprep.subr.mxu0 0.0
    %204 = vmatpush1.msra.mxu0 0.0
    %205 = vmatprep.subr.mxu0 0.0
    %206 = vmatpush1.msra.mxu0 0.0
    %207 = vmatprep.subr.mxu0 0.0
    %208 = vmatpush1.msra.mxu0 0.0
    %209 = vmatprep.subr.mxu0 0.0
    %210 = vmatpush1.msra.mxu0 0.0
    %211 = vmatprep.subr.mxu0 0.0
    %212 = vmatpush1.msra.mxu0 0.0
    %213 = vmatprep.subr.mxu0 0.0
    %214 = vmatpush1.msra.mxu0 0.0
    %215 = vmatprep.subr.mxu0 0.0
    %216 = vmatpush1.msra.mxu0 0.0
    %217 = vmatprep.subr.mxu0 0.0
    %218 = vmatpush1.msra.mxu0 0.0
    %219 = vmatprep.subr.mxu0 0.0
    %220 = vmatpush1.msra.mxu0 0.0
    %221 = vmatprep.subr.mxu0 0.0
    %222 = vmatpush1.msra.mxu0 0.0
    %223 = vmatprep.subr.mxu0 0.0
    %224 = vmatpush1.msra.mxu0 0.0
    %225 = vmatprep.subr.mxu0 0.0
    %226 = vmatpush1.msra.mxu0 0.0
    %227 = vmatprep.subr.mxu0 0.0
    %228 = vmatpush1.msra.mxu0 0.0
    %229 = vmatprep.subr.mxu0 0.0
    %230 = vmatpush1.msra.mxu0 0.0
    %231 = vmatprep.mubr.f32.mxu0 0.0
    %232 = vmatmul.mubr.f32.gmra.mrb[0].mxu0 %v80
    %v233 = vpop.f32.mrb[0].mxu0
    %v234 = vadd.f32 %v150, %v233
    %v235 = vpop.f32.mrb[0].mxu0
    %v236 = vadd.f32 %v154, %v235
    %237 = vdwg.mxu0
    %238 = vmatprep.subr.mxu0 %v84
    %239 = vmatpush1.msra.mxu0 %v83
    %240 = vmatprep.subr.mxu0 %v88
    %241 = vmatpush1.msra.mxu0 %v87
    %242 = vmatprep.subr.mxu0 %v92
    %243 = vmatpush1.msra.mxu0 %v91
    %244 = vmatprep.subr.mxu0 %v96
    %245 = vmatpush1.msra.mxu0 %v95
    %246 = vmatprep.subr.mxu0 %v100
    %247 = vmatpush1.msra.mxu0 %v99
    %248 = vmatprep.subr.mxu0 %v104
    %249 = vmatpush1.msra.mxu0 %v103
    %250 = vmatprep.subr.mxu0 %v108
    %251 = vmatpush1.msra.mxu0 %v107
    %252 = vmatprep.subr.mxu0 %v112
    %253 = vmatpush1.msra.mxu0 %v111
    %254 = vmatprep.subr.mxu0 %v116
    %255 = vmatpush1.msra.mxu0 %v115
    %256 = vmatprep.subr.mxu0 %v120
    %257 = vmatpush1.msra.mxu0 %v119
    %258 = vmatprep.subr.mxu0 %v124
    %259 = vmatpush1.msra.mxu0 %v123
    %260 = vmatprep.subr.mxu0 %v128
    %261 = vmatpush1.msra.mxu0 %v127
    %262 = vmatprep.subr.mxu0 %v132
    %263 = vmatpush1.msra.mxu0 %v131
    %264 = vmatprep.subr.mxu0 %v136
    %265 = vmatpush1.msra.mxu0 %v135
    %266 = vmatprep.subr.mxu0 %v140
    %267 = vmatpush1.msra.mxu0 %v139
    %268 = vmatprep.subr.mxu0 %v144
    %269 = vmatpush1.msra.mxu0 %v143
    %270 = vmatprep.subr.mxu0 0.0
    %271 = vmatpush1.msra.mxu0 0.0
    %272 = vmatprep.subr.mxu0 0.0
    %273 = vmatpush1.msra.mxu0 0.0
    %274 = vmatprep.subr.mxu0 0.0
    %275 = vmatpush1.msra.mxu0 0.0
    %276 = vmatprep.subr.mxu0 0.0
    %277 = vmatpush1.msra.mxu0 0.0
    %278 = vmatprep.subr.mxu0 0.0
    %279 = vmatpush1.msra.mxu0 0.0
    %280 = vmatprep.subr.mxu0 0.0
    %281 = vmatpush1.msra.mxu0 0.0
    %282 = vmatprep.subr.mxu0 0.0
    %283 = vmatpush1.msra.mxu0 0.0
    %284 = vmatprep.subr.mxu0 0.0
    %285 = vmatpush1.msra.mxu0 0.0
    %286 = vmatprep.subr.mxu0 0.0
    %287 = vmatpush1.msra.mxu0 0.0
    %288 = vmatprep.subr.mxu0 0.0
    %289 = vmatpush1.msra.mxu0 0.0
    %290 = vmatprep.subr.mxu0 0.0
    %291 = vmatpush1.msra.mxu0 0.0
    %292 = vmatprep.subr.mxu0 0.0
    %293 = vmatpush1.msra.mxu0 0.0
    %294 = vmatprep.subr.mxu0 0.0
    %295 = vmatpush1.msra.mxu0 0.0
    %296 = vmatprep.subr.mxu0 0.0
    %297 = vmatpush1.msra.mxu0 0.0
    %298 = vmatprep.subr.mxu0 0.0
    %299 = vmatpush1.msra.mxu0 0.0
    %300 = vmatprep.subr.mxu0 0.0
    %301 = vmatpush1.msra.mxu0 0.0
    %302 = vmatprep.mubr.f32.mxu0 0.0
    %303 = vmatmul.mubr.f32.gmra.mrb[0].mxu0 %v80
    %v304 = vpop.f32.mrb[0].mxu0
    %v305 = vadd.f32 %v158, %v304
    %v306 = vpop.f32.mrb[0].mxu0
    %v307 = vadd.f32 %v162, %v306
    %308 = vdwg.mxu0
    %v309 = vmax.f32 %v234, 0.0
    %v310 = vmax.f32 %v236, 0.0
    %v311 = vmax.f32 %v305, 0.0
    %v312 = vmax.f32 %v307, 0.0
    %v313 = vld [vmem:[#allocation7] sm:$0xff]
    %v314 = vld [vmem:[#allocation7 + $0x8] sm:$0xff]
    %v315 = vld [vmem:[#allocation7 + $0x10] sm:$0xff]
    %v316 = vld [vmem:[#allocation7 + $0x18] sm:$0xff]
    %v317 = vld [vmem:[#allocation7 + $0x20] sm:$0xff]
    %v318 = vld [vmem:[#allocation7 + $0x28] sm:$0xff]
    %v319 = vld [vmem:[#allocation7 + $0x30] sm:$0xff]
    %v320 = vld [vmem:[#allocation7 + $0x38] sm:$0xff]
    %v321 = vld [vmem:[#allocation7 + $0x40] sm:$0xff]
    %v322 = vld [vmem:[#allocation7 + $0x48] sm:$0xff]
    %v323 = vld [vmem:[#allocation7 + $0x50] sm:$0xff]
    %v324 = vld [vmem:[#allocation7 + $0x58] sm:$0xff]
    %v325 = vld [vmem:[#allocation7 + $0x60] sm:$0xff]
    %v326 = vld [vmem:[#allocation7 + $0x68] sm:$0xff]
    %v327 = vld [vmem:[#allocation7 + $0x70] sm:$0xff]
    %v328 = vld [vmem:[#allocation7 + $0x78] sm:$0xff]
    %v329 = vld [vmem:[#allocation7 + $0x80] sm:$0xff]
    %v330 = vld [vmem:[#allocation7 + $0x88] sm:$0xff]
    %v331 = vld [vmem:[#allocation7 + $0x90] sm:$0xff]
    %v332 = vld [vmem:[#allocation7 + $0x98] sm:$0xff]
    %v333 = vld [vmem:[#allocation7 + $0xa0] sm:$0xff]
    %v334 = vld [vmem:[#allocation7 + $0xa8] sm:$0xff]
    %v335 = vld [vmem:[#allocation7 + $0xb0] sm:$0xff]
    %v336 = vld [vmem:[#allocation7 + $0xb8] sm:$0xff]
    %v337 = vld [vmem:[#allocation7 + $0xc0] sm:$0xff]
    %v338 = vld [vmem:[#allocation7 + $0xc8] sm:$0xff]
    %v339 = vld [vmem:[#allocation7 + $0xd0] sm:$0xff]
    %v340 = vld [vmem:[#allocation7 + $0xd8] sm:$0xff]
    %v341 = vld [vmem:[#allocation7 + $0xe0] sm:$0xff]
    %v342 = vld [vmem:[#allocation7 + $0xe8] sm:$0xff]
    %v343 = vld [vmem:[#allocation7 + $0xf0] sm:$0xff]
    %v344 = vld [vmem:[#allocation7 + $0xf8] sm:$0xff]
    %v345 = vld [vmem:[#allocation7 + $0x100] sm:$0xff]
    %v346 = vld [vmem:[#allocation7 + $0x108] sm:$0xff]
    %v347 = vld [vmem:[#allocation7 + $0x110] sm:$0xff]
    %v348 = vld [vmem:[#allocation7 + $0x118] sm:$0xff]
    %v349 = vld [vmem:[#allocation7 + $0x120] sm:$0xff]
    %v350 = vld [vmem:[#allocation7 + $0x128] sm:$0xff]
    %v351 = vld [vmem:[#allocation7 + $0x130] sm:$0xff]
    %v352 = vld [vmem:[#allocation7 + $0x138] sm:$0xff]
    %v353 = vld [vmem:[#allocation7 + $0x140] sm:$0xff]
    %v354 = vld [vmem:[#allocation7 + $0x148] sm:$0xff]
    %v355 = vld [vmem:[#allocation7 + $0x150] sm:$0xff]
    %v356 = vld [vmem:[#allocation7 + $0x158] sm:$0xff]
    %v357 = vld [vmem:[#allocation7 + $0x160] sm:$0xff]
    %v358 = vld [vmem:[#allocation7 + $0x168] sm:$0xff]
    %v359 = vld [vmem:[#allocation7 + $0x170] sm:$0xff]
    %v360 = vld [vmem:[#allocation7 + $0x178] sm:$0xff]
    %v361 = vld [vmem:[#allocation7 + $0x180] sm:$0xff]
    %v362 = vld [vmem:[#allocation7 + $0x188] sm:$0xff]
    %v363 = vld [vmem:[#allocation7 + $0x190] sm:$0xff]
    %v364 = vld [vmem:[#allocation7 + $0x198] sm:$0xff]
    %v365 = vld [vmem:[#allocation7 + $0x1a0] sm:$0xff]
    %v366 = vld [vmem:[#allocation7 + $0x1a8] sm:$0xff]
    %v367 = vld [vmem:[#allocation7 + $0x1b0] sm:$0xff]
    %v368 = vld [vmem:[#allocation7 + $0x1b8] sm:$0xff]
    %v369 = vld [vmem:[#allocation7 + $0x1c0] sm:$0xff]
    %v370 = vld [vmem:[#allocation7 + $0x1c8] sm:$0xff]
    %v371 = vld [vmem:[#allocation7 + $0x1d0] sm:$0xff]
    %v372 = vld [vmem:[#allocation7 + $0x1d8] sm:$0xff]
    %v373 = vld [vmem:[#allocation7 + $0x1e0] sm:$0xff]
    %v374 = vld [vmem:[#allocation7 + $0x1e8] sm:$0xff]
    %v375 = vld [vmem:[#allocation7 + $0x1f0] sm:$0xff]
    %v376 = vld [vmem:[#allocation7 + $0x1f8] sm:$0xff]
    %v377 = vld [vmem:[#allocation7 + $0x200] sm:$0xff]
    %v378 = vld [vmem:[#allocation7 + $0x208] sm:$0xff]
    %v379 = vld [vmem:[#allocation7 + $0x210] sm:$0xff]
    %v380 = vld [vmem:[#allocation7 + $0x218] sm:$0xff]
    %v381 = vld [vmem:[#allocation7 + $0x220] sm:$0xff]
    %v382 = vld [vmem:[#allocation7 + $0x228] sm:$0xff]
    %v383 = vld [vmem:[#allocation7 + $0x230] sm:$0xff]
    %v384 = vld [vmem:[#allocation7 + $0x238] sm:$0xff]
    %v385 = vld [vmem:[#allocation7 + $0x240] sm:$0xff]
    %v386 = vld [vmem:[#allocation7 + $0x248] sm:$0xff]
    %v387 = vld [vmem:[#allocation7 + $0x250] sm:$0xff]
    %v388 = vld [vmem:[#allocation7 + $0x258] sm:$0xff]
    %v389 = vld [vmem:[#allocation7 + $0x260] sm:$0xff]
    %v390 = vld [vmem:[#allocation7 + $0x268] sm:$0xff]
    %v391 = vld [vmem:[#allocation7 + $0x270] sm:$0xff]
    %v392 = vld [vmem:[#allocation7 + $0x278] sm:$0xff]
    %v393 = vld [vmem:[#allocation7 + $0x280] sm:$0xff]
    %v394 = vld [vmem:[#allocation7 + $0x288] sm:$0xff]
    %v395 = vld [vmem:[#allocation7 + $0x290] sm:$0xff]
    %v396 = vld [vmem:[#allocation7 + $0x298] sm:$0xff]
    %v397 = vld [vmem:[#allocation7 + $0x2a0] sm:$0xff]
    %v398 = vld [vmem:[#allocation7 + $0x2a8] sm:$0xff]
    %v399 = vld [vmem:[#allocation7 + $0x2b0] sm:$0xff]
    %v400 = vld [vmem:[#allocation7 + $0x2b8] sm:$0xff]
    %v401 = vld [vmem:[#allocation7 + $0x2c0] sm:$0xff]
    %v402 = vld [vmem:[#allocation7 + $0x2c8] sm:$0xff]
    %v403 = vld [vmem:[#allocation7 + $0x2d0] sm:$0xff]
    %v404 = vld [vmem:[#allocation7 + $0x2d8] sm:$0xff]
    %v405 = vld [vmem:[#allocation7 + $0x2e0] sm:$0xff]
    %v406 = vld [vmem:[#allocation7 + $0x2e8] sm:$0xff]
    %v407 = vld [vmem:[#allocation7 + $0x2f0] sm:$0xff]
    %v408 = vld [vmem:[#allocation7 + $0x2f8] sm:$0xff]
    %v409 = vld [vmem:[#allocation7 + $0x300] sm:$0xff]
    %v410 = vld [vmem:[#allocation7 + $0x308] sm:$0xff]
    %v411 = vld [vmem:[#allocation7 + $0x310] sm:$0xff]
    %v412 = vld [vmem:[#allocation7 + $0x318] sm:$0xff]
    %v413 = vld [vmem:[#allocation7 + $0x320] sm:$0xff]
    %v414 = vld [vmem:[#allocation7 + $0x328] sm:$0xff]
    %v415 = vld [vmem:[#allocation7 + $0x330] sm:$0xff]
    %v416 = vld [vmem:[#allocation7 + $0x338] sm:$0xff]
    %v417 = vld [vmem:[#allocation7 + $0x340] sm:$0xff]
    %v418 = vld [vmem:[#allocation7 + $0x348] sm:$0xff]
    %v419 = vld [vmem:[#allocation7 + $0x350] sm:$0xff]
    %v420 = vld [vmem:[#allocation7 + $0x358] sm:$0xff]
    %v421 = vld [vmem:[#allocation7 + $0x360] sm:$0xff]
    %v422 = vld [vmem:[#allocation7 + $0x368] sm:$0xff]
    %v423 = vld [vmem:[#allocation7 + $0x370] sm:$0xff]
    %v424 = vld [vmem:[#allocation7 + $0x378] sm:$0xff]
    %v425 = vld [vmem:[#allocation7 + $0x380] sm:$0xff]
    %v426 = vld [vmem:[#allocation7 + $0x388] sm:$0xff]
    %v427 = vld [vmem:[#allocation7 + $0x390] sm:$0xff]
    %v428 = vld [vmem:[#allocation7 + $0x398] sm:$0xff]
    %v429 = vld [vmem:[#allocation7 + $0x3a0] sm:$0xff]
    %v430 = vld [vmem:[#allocation7 + $0x3a8] sm:$0xff]
    %v431 = vld [vmem:[#allocation7 + $0x3b0] sm:$0xff]
    %v432 = vld [vmem:[#allocation7 + $0x3b8] sm:$0xff]
    %v433 = vld [vmem:[#allocation7 + $0x3c0] sm:$0xff]
    %v434 = vld [vmem:[#allocation7 + $0x3c8] sm:$0xff]
    %v435 = vld [vmem:[#allocation7 + $0x3d0] sm:$0xff]
    %v436 = vld [vmem:[#allocation7 + $0x3d8] sm:$0xff]
    %v437 = vld [vmem:[#allocation7 + $0x3e0] sm:$0xff]
    %v438 = vld [vmem:[#allocation7 + $0x3e8] sm:$0xff]
    %v439 = vld [vmem:[#allocation7 + $0x3f0] sm:$0xff]
    %v440 = vld [vmem:[#allocation7 + $0x3f8] sm:$0xff]
    %v441 = vld [vmem:[#allocation7 + $0x400] sm:$0xff]
    %v442 = vld [vmem:[#allocation7 + $0x408] sm:$0xff]
    %v443 = vld [vmem:[#allocation7 + $0x410] sm:$0xff]
    %v444 = vld [vmem:[#allocation7 + $0x418] sm:$0xff]
    %v445 = vld [vmem:[#allocation7 + $0x420] sm:$0xff]
    %v446 = vld [vmem:[#allocation7 + $0x428] sm:$0xff]
    %v447 = vld [vmem:[#allocation7 + $0x430] sm:$0xff]
    %v448 = vld [vmem:[#allocation7 + $0x438] sm:$0xff]
    %v449 = vld [vmem:[#allocation7 + $0x440] sm:$0xff]
    %v450 = vld [vmem:[#allocation7 + $0x448] sm:$0xff]
    %v451 = vld [vmem:[#allocation7 + $0x450] sm:$0xff]
    %v452 = vld [vmem:[#allocation7 + $0x458] sm:$0xff]
    %v453 = vld [vmem:[#allocation7 + $0x460] sm:$0xff]
    %v454 = vld [vmem:[#allocation7 + $0x468] sm:$0xff]
    %v455 = vld [vmem:[#allocation7 + $0x470] sm:$0xff]
    %v456 = vld [vmem:[#allocation7 + $0x478] sm:$0xff]
    %v457 = vld [vmem:[#allocation7 + $0x480] sm:$0xff]
    %v458 = vld [vmem:[#allocation7 + $0x488] sm:$0xff]
    %v459 = vld [vmem:[#allocation7 + $0x490] sm:$0xff]
    %v460 = vld [vmem:[#allocation7 + $0x498] sm:$0xff]
    %v461 = vld [vmem:[#allocation7 + $0x4a0] sm:$0xff]
    %v462 = vld [vmem:[#allocation7 + $0x4a8] sm:$0xff]
    %v463 = vld [vmem:[#allocation7 + $0x4b0] sm:$0xff]
    %v464 = vld [vmem:[#allocation7 + $0x4b8] sm:$0xff]
    %v465 = vld [vmem:[#allocation7 + $0x4c0] sm:$0xff]
    %v466 = vld [vmem:[#allocation7 + $0x4c8] sm:$0xff]
    %v467 = vld [vmem:[#allocation7 + $0x4d0] sm:$0xff]
    %v468 = vld [vmem:[#allocation7 + $0x4d8] sm:$0xff]
    %v469 = vld [vmem:[#allocation7 + $0x4e0] sm:$0xff]
    %v470 = vld [vmem:[#allocation7 + $0x4e8] sm:$0xff]
    %v471 = vld [vmem:[#allocation7 + $0x4f0] sm:$0xff]
    %v472 = vld [vmem:[#allocation7 + $0x4f8] sm:$0xff]
    %v473 = vld [vmem:[#allocation7 + $0x500] sm:$0xff]
    %v474 = vld [vmem:[#allocation7 + $0x508] sm:$0xff]
    %v475 = vld [vmem:[#allocation7 + $0x510] sm:$0xff]
    %v476 = vld [vmem:[#allocation7 + $0x518] sm:$0xff]
    %v477 = vld [vmem:[#allocation7 + $0x520] sm:$0xff]
    %v478 = vld [vmem:[#allocation7 + $0x528] sm:$0xff]
    %v479 = vld [vmem:[#allocation7 + $0x530] sm:$0xff]
    %v480 = vld [vmem:[#allocation7 + $0x538] sm:$0xff]
    %v481 = vld [vmem:[#allocation7 + $0x540] sm:$0xff]
    %v482 = vld [vmem:[#allocation7 + $0x548] sm:$0xff]
    %v483 = vld [vmem:[#allocation7 + $0x550] sm:$0xff]
    %v484 = vld [vmem:[#allocation7 + $0x558] sm:$0xff]
    %v485 = vld [vmem:[#allocation7 + $0x560] sm:$0xff]
    %v486 = vld [vmem:[#allocation7 + $0x568] sm:$0xff]
    %v487 = vld [vmem:[#allocation7 + $0x570] sm:$0xff]
    %v488 = vld [vmem:[#allocation7 + $0x578] sm:$0xff]
    %v489 = vld [vmem:[#allocation7 + $0x580] sm:$0xff]
    %v490 = vld [vmem:[#allocation7 + $0x588] sm:$0xff]
    %v491 = vld [vmem:[#allocation7 + $0x590] sm:$0xff]
    %v492 = vld [vmem:[#allocation7 + $0x598] sm:$0xff]
    %v493 = vld [vmem:[#allocation7 + $0x5a0] sm:$0xff]
    %v494 = vld [vmem:[#allocation7 + $0x5a8] sm:$0xff]
    %v495 = vld [vmem:[#allocation7 + $0x5b0] sm:$0xff]
    %v496 = vld [vmem:[#allocation7 + $0x5b8] sm:$0xff]
    %v497 = vld [vmem:[#allocation7 + $0x5c0] sm:$0xff]
    %v498 = vld [vmem:[#allocation7 + $0x5c8] sm:$0xff]
    %v499 = vld [vmem:[#allocation7 + $0x5d0] sm:$0xff]
    %v500 = vld [vmem:[#allocation7 + $0x5d8] sm:$0xff]
    %v501 = vld [vmem:[#allocation7 + $0x5e0] sm:$0xff]
    %v502 = vld [vmem:[#allocation7 + $0x5e8] sm:$0xff]
    %v503 = vld [vmem:[#allocation7 + $0x5f0] sm:$0xff]
    %v504 = vld [vmem:[#allocation7 + $0x5f8] sm:$0xff]
    %v505 = vld [vmem:[%s4] sm:$0x7]
    %v507 = vlaneseq
    %v508 = vshrl.u32 %v507, 7
    %v509 = vsub.s32 0, %v508
    %v510 = vrot.slane %v505, %v509
    %v511 = vlaneseq
    %v512 = vshrl.u32 %v511, 7
    %v513 = vsub.s32 1, %v512
    %v514 = vrot.slane %v505, %v513
    %v515 = vlaneseq
    %v516 = vshrl.u32 %v515, 7
    %v517 = vsub.s32 2, %v516
    %v518 = vrot.slane %v505, %v517
    %522 = vmatprep.subr.mxu0 %v314
    %523 = vmatpush1.msra.mxu0 %v313
    %524 = vmatprep.subr.mxu0 %v317
    %525 = vmatpush1.msra.mxu0 %v316
    %526 = vmatprep.subr.mxu0 %v320
    %527 = vmatpush1.msra.mxu0 %v319
    %528 = vmatprep.subr.mxu0 %v323
    %529 = vmatpush1.msra.mxu0 %v322
    %530 = vmatprep.subr.mxu0 %v326
    %531 = vmatpush1.msra.mxu0 %v325
    %532 = vmatprep.subr.mxu0 %v329
    %533 = vmatpush1.msra.mxu0 %v328
    %534 = vmatprep.subr.mxu0 %v332
    %535 = vmatpush1.msra.mxu0 %v331
    %536 = vmatprep.subr.mxu0 %v335
    %537 = vmatpush1.msra.mxu0 %v334
    %538 = vmatprep.subr.mxu0 %v338
    %539 = vmatpush1.msra.mxu0 %v337
    %540 = vmatprep.subr.mxu0 %v341
    %541 = vmatpush1.msra.mxu0 %v340
    %542 = vmatprep.subr.mxu0 %v344
    %543 = vmatpush1.msra.mxu0 %v343
    %544 = vmatprep.subr.mxu0 %v347
    %545 = vmatpush1.msra.mxu0 %v346
    %546 = vmatprep.subr.mxu0 %v350
    %547 = vmatpush1.msra.mxu0 %v349
    %548 = vmatprep.subr.mxu0 %v353
    %549 = vmatpush1.msra.mxu0 %v352
    %550 = vmatprep.subr.mxu0 %v356
    %551 = vmatpush1.msra.mxu0 %v355
    %552 = vmatprep.subr.mxu0 %v359
    %553 = vmatpush1.msra.mxu0 %v358
    %554 = vmatprep.subr.mxu0 %v362
    %555 = vmatpush1.msra.mxu0 %v361
    %556 = vmatprep.subr.mxu0 %v365
    %557 = vmatpush1.msra.mxu0 %v364
    %558 = vmatprep.subr.mxu0 %v368
    %559 = vmatpush1.msra.mxu0 %v367
    %560 = vmatprep.subr.mxu0 %v371
    %561 = vmatpush1.msra.mxu0 %v370
    %562 = vmatprep.subr.mxu0 %v374
    %563 = vmatpush1.msra.mxu0 %v373
    %564 = vmatprep.subr.mxu0 %v377
    %565 = vmatpush1.msra.mxu0 %v376
    %566 = vmatprep.subr.mxu0 %v380
    %567 = vmatpush1.msra.mxu0 %v379
    %568 = vmatprep.subr.mxu0 %v383
    %569 = vmatpush1.msra.mxu0 %v382
    %570 = vmatprep.subr.mxu0 %v386
    %571 = vmatpush1.msra.mxu0 %v385
    %572 = vmatprep.subr.mxu0 %v389
    %573 = vmatpush1.msra.mxu0 %v388
    %574 = vmatprep.subr.mxu0 %v392
    %575 = vmatpush1.msra.mxu0 %v391
    %576 = vmatprep.subr.mxu0 %v395
    %577 = vmatpush1.msra.mxu0 %v394
    %578 = vmatprep.subr.mxu0 %v398
    %579 = vmatpush1.msra.mxu0 %v397
    %580 = vmatprep.subr.mxu0 %v401
    %581 = vmatpush1.msra.mxu0 %v400
    %582 = vmatprep.subr.mxu0 %v404
    %583 = vmatpush1.msra.mxu0 %v403
    %584 = vmatprep.subr.mxu0 %v407
    %585 = vmatpush1.msra.mxu0 %v406
    %586 = vmatprep.mubr.f32.mxu0 %v310
    %587 = vmatmul.mubr.f32.gmra.mrb[0].mxu0 %v309
    %v588 = vpop.f32.mrb[0].mxu0
    %v589 = vadd.f32 %v510, %v588
    %v590 = vpop.f32.mrb[0].mxu0
    %v591 = vadd.f32 %v514, %v590
    %592 = vdwg.mxu0
    %593 = vmatprep.subr.mxu0 %v410
    %594 = vmatpush1.msra.mxu0 %v409
    %595 = vmatprep.subr.mxu0 %v413
    %596 = vmatpush1.msra.mxu0 %v412
    %597 = vmatprep.subr.mxu0 %v416
    %598 = vmatpush1.msra.mxu0 %v415
    %599 = vmatprep.subr.mxu0 %v419
    %600 = vmatpush1.msra.mxu0 %v418
    %601 = vmatprep.subr.mxu0 %v422
    %602 = vmatpush1.msra.mxu0 %v421
    %603 = vmatprep.subr.mxu0 %v425
    %604 = vmatpush1.msra.mxu0 %v424
    %605 = vmatprep.subr.mxu0 %v428
    %606 = vmatpush1.msra.mxu0 %v427
    %607 = vmatprep.subr.mxu0 %v431
    %608 = vmatpush1.msra.mxu0 %v430
    %609 = vmatprep.subr.mxu0 %v434
    %610 = vmatpush1.msra.mxu0 %v433
    %611 = vmatprep.subr.mxu0 %v437
    %612 = vmatpush1.msra.mxu0 %v436
    %613 = vmatprep.subr.mxu0 %v440
    %614 = vmatpush1.msra.mxu0 %v439
    %615 = vmatprep.subr.mxu0 %v443
    %616 = vmatpush1.msra.mxu0 %v442
    %617 = vmatprep.subr.mxu0 %v446
    %618 = vmatpush1.msra.mxu0 %v445
    %619 = vmatprep.subr.mxu0 %v449
    %620 = vmatpush1.msra.mxu0 %v448
    %621 = vmatprep.subr.mxu0 %v452
    %622 = vmatpush1.msra.mxu0 %v451
    %623 = vmatprep.subr.mxu0 %v455
    %624 = vmatpush1.msra.mxu0 %v454
    %625 = vmatprep.subr.mxu0 %v458
    %626 = vmatpush1.msra.mxu0 %v457
    %627 = vmatprep.subr.mxu0 %v461
    %628 = vmatpush1.msra.mxu0 %v460
    %629 = vmatprep.subr.mxu0 %v464
    %630 = vmatpush1.msra.mxu0 %v463
    %631 = vmatprep.subr.mxu0 %v467
    %632 = vmatpush1.msra.mxu0 %v466
    %633 = vmatprep.subr.mxu0 %v470
    %634 = vmatpush1.msra.mxu0 %v469
    %635 = vmatprep.subr.mxu0 %v473
    %636 = vmatpush1.msra.mxu0 %v472
    %637 = vmatprep.subr.mxu0 %v476
    %638 = vmatpush1.msra.mxu0 %v475
    %639 = vmatprep.subr.mxu0 %v479
    %640 = vmatpush1.msra.mxu0 %v478
    %641 = vmatprep.subr.mxu0 %v482
    %642 = vmatpush1.msra.mxu0 %v481
    %643 = vmatprep.subr.mxu0 %v485
    %644 = vmatpush1.msra.mxu0 %v484
    %645 = vmatprep.subr.mxu0 %v488
    %646 = vmatpush1.msra.mxu0 %v487
    %647 = vmatprep.subr.mxu0 %v491
    %648 = vmatpush1.msra.mxu0 %v490
    %649 = vmatprep.subr.mxu0 %v494
    %650 = vmatpush1.msra.mxu0 %v493
    %651 = vmatprep.subr.mxu0 %v497
    %652 = vmatpush1.msra.mxu0 %v496
    %653 = vmatprep.subr.mxu0 %v500
    %654 = vmatpush1.msra.mxu0 %v499
    %655 = vmatprep.subr.mxu0 %v503
    %656 = vmatpush1.msra.mxu0 %v502
    %657 = vmatprep.mubr.f32.mxu0 %v312
    %658 = vmatmul.mubr.f32.gmra.mrb[0].mxu0 %v311
    %v659 = vpop.f32.mrb[0].mxu0
    %v660 = vadd.f32 %v589, %v659
    %v661 = vpop.f32.mrb[0].mxu0
    %v662 = vadd.f32 %v591, %v661
    %663 = vdwg.mxu0
    %664 = vmatprep.subr.mxu0 0.0
    %665 = vmatpush1.msra.mxu0 %v315
    %666 = vmatprep.subr.mxu0 0.0
    %667 = vmatpush1.msra.mxu0 %v318
    %668 = vmatprep.subr.mxu0 0.0
    %669 = vmatpush1.msra.mxu0 %v321
    %670 = vmatprep.subr.mxu0 0.0
    %671 = vmatpush1.msra.mxu0 %v324
    %672 = vmatprep.subr.mxu0 0.0
    %673 = vmatpush1.msra.mxu0 %v327
    %674 = vmatprep.subr.mxu0 0.0
    %675 = vmatpush1.msra.mxu0 %v330
    %676 = vmatprep.subr.mxu0 0.0
    %677 = vmatpush1.msra.mxu0 %v333
    %678 = vmatprep.subr.mxu0 0.0
    %679 = vmatpush1.msra.mxu0 %v336
    %680 = vmatprep.subr.mxu0 0.0
    %681 = vmatpush1.msra.mxu0 %v339
    %682 = vmatprep.subr.mxu0 0.0
    %683 = vmatpush1.msra.mxu0 %v342
    %684 = vmatprep.subr.mxu0 0.0
    %685 = vmatpush1.msra.mxu0 %v345
    %686 = vmatprep.subr.mxu0 0.0
    %687 = vmatpush1.msra.mxu0 %v348
    %688 = vmatprep.subr.mxu0 0.0
    %689 = vmatpush1.msra.mxu0 %v351
    %690 = vmatprep.subr.mxu0 0.0
    %691 = vmatpush1.msra.mxu0 %v354
    %692 = vmatprep.subr.mxu0 0.0
    %693 = vmatpush1.msra.mxu0 %v357
    %694 = vmatprep.subr.mxu0 0.0
    %695 = vmatpush1.msra.mxu0 %v360
    %696 = vmatprep.subr.mxu0 0.0
    %697 = vmatpush1.msra.mxu0 %v363
    %698 = vmatprep.subr.mxu0 0.0
    %699 = vmatpush1.msra.mxu0 %v366
    %700 = vmatprep.subr.mxu0 0.0
    %701 = vmatpush1.msra.mxu0 %v369
    %702 = vmatprep.subr.mxu0 0.0
    %703 = vmatpush1.msra.mxu0 %v372
    %704 = vmatprep.subr.mxu0 0.0
    %705 = vmatpush1.msra.mxu0 %v375
    %706 = vmatprep.subr.mxu0 0.0
    %707 = vmatpush1.msra.mxu0 %v378
    %708 = vmatprep.subr.mxu0 0.0
    %709 = vmatpush1.msra.mxu0 %v381
    %710 = vmatprep.subr.mxu0 0.0
    %711 = vmatpush1.msra.mxu0 %v384
    %712 = vmatprep.subr.mxu0 0.0
    %713 = vmatpush1.msra.mxu0 %v387
    %714 = vmatprep.subr.mxu0 0.0
    %715 = vmatpush1.msra.mxu0 %v390
    %716 = vmatprep.subr.mxu0 0.0
    %717 = vmatpush1.msra.mxu0 %v393
    %718 = vmatprep.subr.mxu0 0.0
    %719 = vmatpush1.msra.mxu0 %v396
    %720 = vmatprep.subr.mxu0 0.0
    %721 = vmatpush1.msra.mxu0 %v399
    %722 = vmatprep.subr.mxu0 0.0
    %723 = vmatpush1.msra.mxu0 %v402
    %724 = vmatprep.subr.mxu0 0.0
    %725 = vmatpush1.msra.mxu0 %v405
    %726 = vmatprep.subr.mxu0 0.0
    %727 = vmatpush1.msra.mxu0 %v408
    %728 = vmatprep.mubr.f32.mxu0 %v310
    %729 = vmatmul.mubr.f32.gmra.mrb[0].mxu0 %v309
    %v730 = vpop.f32.mrb[0].mxu0
    %v731 = vadd.f32 %v518, %v730
    %v732 = vpop.f32.mrb[0].mxu0
    %733 = vdwg.mxu0
    %734 = vmatprep.subr.mxu0 0.0
    %735 = vmatpush1.msra.mxu0 %v411
    %736 = vmatprep.subr.mxu0 0.0
    %737 = vmatpush1.msra.mxu0 %v414
    %738 = vmatprep.subr.mxu0 0.0
    %739 = vmatpush1.msra.mxu0 %v417
    %740 = vmatprep.subr.mxu0 0.0
    %741 = vmatpush1.msra.mxu0 %v420
    %742 = vmatprep.subr.mxu0 0.0
    %743 = vmatpush1.msra.mxu0 %v423
    %744 = vmatprep.subr.mxu0 0.0
    %745 = vmatpush1.msra.mxu0 %v426
    %746 = vmatprep.subr.mxu0 0.0
    %747 = vmatpush1.msra.mxu0 %v429
    %748 = vmatprep.subr.mxu0 0.0
    %749 = vmatpush1.msra.mxu0 %v432
    %750 = vmatprep.subr.mxu0 0.0
    %751 = vmatpush1.msra.mxu0 %v435
    %752 = vmatprep.subr.mxu0 0.0
    %753 = vmatpush1.msra.mxu0 %v438
    %754 = vmatprep.subr.mxu0 0.0
    %755 = vmatpush1.msra.mxu0 %v441
    %756 = vmatprep.subr.mxu0 0.0
    %757 = vmatpush1.msra.mxu0 %v444
    %758 = vmatprep.subr.mxu0 0.0
    %759 = vmatpush1.msra.mxu0 %v447
    %760 = vmatprep.subr.mxu0 0.0
    %761 = vmatpush1.msra.mxu0 %v450
    %762 = vmatprep.subr.mxu0 0.0
    %763 = vmatpush1.msra.mxu0 %v453
    %764 = vmatprep.subr.mxu0 0.0
    %765 = vmatpush1.msra.mxu0 %v456
    %766 = vmatprep.subr.mxu0 0.0
    %767 = vmatpush1.msra.mxu0 %v459
    %768 = vmatprep.subr.mxu0 0.0
    %769 = vmatpush1.msra.mxu0 %v462
    %770 = vmatprep.subr.mxu0 0.0
    %771 = vmatpush1.msra.mxu0 %v465
    %772 = vmatprep.subr.mxu0 0.0
    %773 = vmatpush1.msra.mxu0 %v468
    %774 = vmatprep.subr.mxu0 0.0
    %775 = vmatpush1.msra.mxu0 %v471
    %776 = vmatprep.subr.mxu0 0.0
    %777 = vmatpush1.msra.mxu0 %v474
    %778 = vmatprep.subr.mxu0 0.0
    %779 = vmatpush1.msra.mxu0 %v477
    %780 = vmatprep.subr.mxu0 0.0
    %781 = vmatpush1.msra.mxu0 %v480
    %782 = vmatprep.subr.mxu0 0.0
    %783 = vmatpush1.msra.mxu0 %v483
    %784 = vmatprep.subr.mxu0 0.0
    %785 = vmatpush1.msra.mxu0 %v486
    %786 = vmatprep.subr.mxu0 0.0
    %787 = vmatpush1.msra.mxu0 %v489
    %788 = vmatprep.subr.mxu0 0.0
    %789 = vmatpush1.msra.mxu0 %v492
    %790 = vmatprep.subr.mxu0 0.0
    %791 = vmatpush1.msra.mxu0 %v495
    %792 = vmatprep.subr.mxu0 0.0
    %793 = vmatpush1.msra.mxu0 %v498
    %794 = vmatprep.subr.mxu0 0.0
    %795 = vmatpush1.msra.mxu0 %v501
    %796 = vmatprep.subr.mxu0 0.0
    %797 = vmatpush1.msra.mxu0 %v504
    %798 = vmatprep.mubr.f32.mxu0 %v312
    %799 = vmatmul.mubr.f32.gmra.mrb[0].mxu0 %v311
    %v800 = vpop.f32.mrb[0].mxu0
    %v801 = vadd.f32 %v731, %v800
    %v802 = vpop.f32.mrb[0].mxu0
    %803 = vdwg.mxu0
    %v804 = vmax.f32 %v660, 0.0
    %v805 = vmax.f32 %v662, 0.0
    %v806 = vmax.f32 %v801, 0.0
    %v807 = vld [vmem:[#allocation8] sm:$0xff]
    %v808 = vld [vmem:[#allocation8 + $0x8] sm:$0xff]
    %v809 = vld [vmem:[#allocation8 + $0x10] sm:$0xff]
    %v810 = vld [vmem:[#allocation8 + $0x18] sm:$0xff]
    %v811 = vld [vmem:[#allocation8 + $0x20] sm:$0xff]
    %v812 = vld [vmem:[#allocation8 + $0x28] sm:$0xff]
    %v813 = vld [vmem:[#allocation8 + $0x30] sm:$0xff]
    %v814 = vld [vmem:[#allocation8 + $0x38] sm:$0xff]
    %v815 = vld [vmem:[#allocation8 + $0x40] sm:$0xff]
    %v816 = vld [vmem:[#allocation8 + $0x48] sm:$0xff]
    %v817 = vld [vmem:[#allocation8 + $0x50] sm:$0xff]
    %v818 = vld [vmem:[#allocation8 + $0x58] sm:$0xff]
    %v819 = vld [vmem:[#allocation8 + $0x60] sm:$0xff]
    %v820 = vld [vmem:[#allocation8 + $0x68] sm:$0xff]
    %v821 = vld [vmem:[#allocation8 + $0x70] sm:$0xff]
    %v822 = vld [vmem:[#allocation8 + $0x78] sm:$0xff]
    %v823 = vld [vmem:[#allocation8 + $0x80] sm:$0xff]
    %v824 = vld [vmem:[#allocation8 + $0x88] sm:$0xff]
    %v825 = vld [vmem:[#allocation8 + $0x90] sm:$0xff]
    %v826 = vld [vmem:[#allocation8 + $0x98] sm:$0xff]
    %v827 = vld [vmem:[#allocation8 + $0xa0] sm:$0xff]
    %v828 = vld [vmem:[#allocation8 + $0xa8] sm:$0xff]
    %v829 = vld [vmem:[#allocation8 + $0xb0] sm:$0xff]
    %v830 = vld [vmem:[#allocation8 + $0xb8] sm:$0xff]
    %v831 = vld [vmem:[#allocation8 + $0xc0] sm:$0xff]
    %v832 = vld [vmem:[#allocation8 + $0xc8] sm:$0xff]
    %v833 = vld [vmem:[#allocation8 + $0xd0] sm:$0xff]
    %v834 = vld [vmem:[#allocation8 + $0xd8] sm:$0xff]
    %v835 = vld [vmem:[#allocation8 + $0xe0] sm:$0xff]
    %v836 = vld [vmem:[#allocation8 + $0xe8] sm:$0xff]
    %v837 = vld [vmem:[#allocation8 + $0xf0] sm:$0xff]
    %v838 = vld [vmem:[#allocation8 + $0xf8] sm:$0xff]
    %v839 = vld [vmem:[#allocation8 + $0x100] sm:$0xff]
    %v840 = vld [vmem:[#allocation8 + $0x108] sm:$0xff]
    %v841 = vld [vmem:[#allocation8 + $0x110] sm:$0xff]
    %v842 = vld [vmem:[#allocation8 + $0x118] sm:$0xff]
    %v843 = vld [vmem:[#allocation8 + $0x120] sm:$0xff]
    %v844 = vld [vmem:[#allocation8 + $0x128] sm:$0xff]
    %v845 = vld [vmem:[#allocation8 + $0x130] sm:$0xff]
    %v846 = vld [vmem:[#allocation8 + $0x138] sm:$0xff]
    %v847 = vld [vmem:[#allocation8 + $0x140] sm:$0xff]
    %v848 = vld [vmem:[#allocation8 + $0x148] sm:$0xff]
    %v849 = vld [vmem:[#allocation8 + $0x150] sm:$0xff]
    %v850 = vld [vmem:[#allocation8 + $0x158] sm:$0xff]
    %v851 = vld [vmem:[#allocation8 + $0x160] sm:$0xff]
    %v852 = vld [vmem:[#allocation8 + $0x168] sm:$0xff]
    %v853 = vld [vmem:[#allocation8 + $0x170] sm:$0xff]
    %v854 = vld [vmem:[#allocation8 + $0x178] sm:$0xff]
    %v855 = vld [vmem:[%s6] sm:$0x1]
    %v857 = vlaneseq
    %v858 = vshrl.u32 %v857, 7
    %v859 = vsub.s32 0, %v858
    %v860 = vrot.slane %v855, %v859
    %862 = vmatprep.subr.mxu0 0.0
    %863 = vmatpush1.msra.mxu0 %v807
    %864 = vmatprep.subr.mxu0 0.0
    %865 = vmatpush1.msra.mxu0 %v808
    %866 = vmatprep.subr.mxu0 0.0
    %867 = vmatpush1.msra.mxu0 %v809
    %868 = vmatprep.subr.mxu0 0.0
    %869 = vmatpush1.msra.mxu0 %v810
    %870 = vmatprep.subr.mxu0 0.0
    %871 = vmatpush1.msra.mxu0 %v811
    %872 = vmatprep.subr.mxu0 0.0
    %873 = vmatpush1.msra.mxu0 %v812
    %874 = vmatprep.subr.mxu0 0.0
    %875 = vmatpush1.msra.mxu0 %v813
    %876 = vmatprep.subr.mxu0 0.0
    %877 = vmatpush1.msra.mxu0 %v814
    %878 = vmatprep.subr.mxu0 0.0
    %879 = vmatpush1.msra.mxu0 %v815
    %880 = vmatprep.subr.mxu0 0.0
    %881 = vmatpush1.msra.mxu0 %v816
    %882 = vmatprep.subr.mxu0 0.0
    %883 = vmatpush1.msra.mxu0 %v817
    %884 = vmatprep.subr.mxu0 0.0
    %885 = vmatpush1.msra.mxu0 %v818
    %886 = vmatprep.subr.mxu0 0.0
    %887 = vmatpush1.msra.mxu0 %v819
    %888 = vmatprep.subr.mxu0 0.0
    %889 = vmatpush1.msra.mxu0 %v820
    %890 = vmatprep.subr.mxu0 0.0
    %891 = vmatpush1.msra.mxu0 %v821
    %892 = vmatprep.subr.mxu0 0.0
    %893 = vmatpush1.msra.mxu0 %v822
    %894 = vmatprep.subr.mxu0 0.0
    %895 = vmatpush1.msra.mxu0 %v823
    %896 = vmatprep.subr.mxu0 0.0
    %897 = vmatpush1.msra.mxu0 %v824
    %898 = vmatprep.subr.mxu0 0.0
    %899 = vmatpush1.msra.mxu0 %v825
    %900 = vmatprep.subr.mxu0 0.0
    %901 = vmatpush1.msra.mxu0 %v826
    %902 = vmatprep.subr.mxu0 0.0
    %903 = vmatpush1.msra.mxu0 %v827
    %904 = vmatprep.subr.mxu0 0.0
    %905 = vmatpush1.msra.mxu0 %v828
    %906 = vmatprep.subr.mxu0 0.0
    %907 = vmatpush1.msra.mxu0 %v829
    %908 = vmatprep.subr.mxu0 0.0
    %909 = vmatpush1.msra.mxu0 %v830
    %910 = vmatprep.subr.mxu0 0.0
    %911 = vmatpush1.msra.mxu0 %v831
    %912 = vmatprep.subr.mxu0 0.0
    %913 = vmatpush1.msra.mxu0 %v832
    %914 = vmatprep.subr.mxu0 0.0
    %915 = vmatpush1.msra.mxu0 %v833
    %916 = vmatprep.subr.mxu0 0.0
    %917 = vmatpush1.msra.mxu0 %v834
    %918 = vmatprep.subr.mxu0 0.0
    %919 = vmatpush1.msra.mxu0 %v835
    %920 = vmatprep.subr.mxu0 0.0
    %921 = vmatpush1.msra.mxu0 %v836
    %922 = vmatprep.subr.mxu0 0.0
    %923 = vmatpush1.msra.mxu0 %v837
    %924 = vmatprep.subr.mxu0 0.0
    %925 = vmatpush1.msra.mxu0 %v838
    %926 = vmatprep.mubr.f32.mxu0 %v805
    %927 = vmatmul.mubr.f32.gmra.mrb[0].mxu0 %v804
    %v928 = vpop.f32.mrb[0].mxu0
    %v929 = vadd.f32 %v860, %v928
    %v930 = vpop.f32.mrb[0].mxu0
    %931 = vdwg.mxu0
    %932 = vmatprep.subr.mxu0 0.0
    %933 = vmatpush1.msra.mxu0 %v839
    %934 = vmatprep.subr.mxu0 0.0
    %935 = vmatpush1.msra.mxu0 %v840
    %936 = vmatprep.subr.mxu0 0.0
    %937 = vmatpush1.msra.mxu0 %v841
    %938 = vmatprep.subr.mxu0 0.0
    %939 = vmatpush1.msra.mxu0 %v842
    %940 = vmatprep.subr.mxu0 0.0
    %941 = vmatpush1.msra.mxu0 %v843
    %942 = vmatprep.subr.mxu0 0.0
    %943 = vmatpush1.msra.mxu0 %v844
    %944 = vmatprep.subr.mxu0 0.0
    %945 = vmatpush1.msra.mxu0 %v845
    %946 = vmatprep.subr.mxu0 0.0
    %947 = vmatpush1.msra.mxu0 %v846
    %948 = vmatprep.subr.mxu0 0.0
    %949 = vmatpush1.msra.mxu0 %v847
    %950 = vmatprep.subr.mxu0 0.0
    %951 = vmatpush1.msra.mxu0 %v848
    %952 = vmatprep.subr.mxu0 0.0
    %953 = vmatpush1.msra.mxu0 %v849
    %954 = vmatprep.subr.mxu0 0.0
    %955 = vmatpush1.msra.mxu0 %v850
    %956 = vmatprep.subr.mxu0 0.0
    %957 = vmatpush1.msra.mxu0 %v851
    %958 = vmatprep.subr.mxu0 0.0
    %959 = vmatpush1.msra.mxu0 %v852
    %960 = vmatprep.subr.mxu0 0.0
    %961 = vmatpush1.msra.mxu0 %v853
    %962 = vmatprep.subr.mxu0 0.0
    %963 = vmatpush1.msra.mxu0 %v854
    %964 = vmatprep.subr.mxu0 0.0
    %965 = vmatpush1.msra.mxu0 0.0
    %966 = vmatprep.subr.mxu0 0.0
    %967 = vmatpush1.msra.mxu0 0.0
    %968 = vmatprep.subr.mxu0 0.0
    %969 = vmatpush1.msra.mxu0 0.0
    %970 = vmatprep.subr.mxu0 0.0
    %971 = vmatpush1.msra.mxu0 0.0
    %972 = vmatprep.subr.mxu0 0.0
    %973 = vmatpush1.msra.mxu0 0.0
    %974 = vmatprep.subr.mxu0 0.0
    %975 = vmatpush1.msra.mxu0 0.0
    %976 = vmatprep.subr.mxu0 0.0
    %977 = vmatpush1.msra.mxu0 0.0
    %978 = vmatprep.subr.mxu0 0.0
    %979 = vmatpush1.msra.mxu0 0.0
    %980 = vmatprep.subr.mxu0 0.0
    %981 = vmatpush1.msra.mxu0 0.0
    %982 = vmatprep.subr.mxu0 0.0
    %983 = vmatpush1.msra.mxu0 0.0
    %984 = vmatprep.subr.mxu0 0.0
    %985 = vmatpush1.msra.mxu0 0.0
    %986 = vmatprep.subr.mxu0 0.0
    %987 = vmatpush1.msra.mxu0 0.0
    %988 = vmatprep.subr.mxu0 0.0
    %989 = vmatpush1.msra.mxu0 0.0
    %990 = vmatprep.subr.mxu0 0.0
    %991 = vmatpush1.msra.mxu0 0.0
    %992 = vmatprep.subr.mxu0 0.0
    %993 = vmatpush1.msra.mxu0 0.0
    %994 = vmatprep.subr.mxu0 0.0
    %995 = vmatpush1.msra.mxu0 0.0
    %996 = vmatprep.mubr.f32.mxu0 0.0
    %997 = vmatmul.mubr.f32.gmra.mrb[0].mxu0 %v806
    %v998 = vpop.f32.mrb[0].mxu0
    %v999 = vadd.f32 %v929, %v998
    %v1000 = vpop.f32.mrb[0].mxu0
    %1001 = vdwg.mxu0
    %v1002 = vtanh.pop %v999
    %v1003 = vmul.f32 %v1002, 90.0
    %1004 = vst [vmem:[#allocation10] sm:$0xff] %v1003
    // Predicated region
    $region46: #{tpu_custom_call.1} parent=1 // pred_check
      _
    $region47: #{tpu_custom_call.1} parent=1 // pred_check_branch
      %1006 = sbr.rel (0) target = $region49
    $region48: #{tpu_custom_call.1} parent=1 // pred_region
      %s1008 = ssub.s32 128, 128
      %1009 = vsyncadd [#allocation4], %s1008
      %s1011 = sshll.u32 [#allocation10], 4
      %s1012 = int_to_ptr.vmem [resolvable:$true] %s1011
      %1014 = dma.vmem_to_hbm [thread:$0]  %s1012, 128, %s7, [#allocation4]
    $region49: #{tpu_custom_call.1} parent=1 // pred_fallthru
      _
    // Predicated region
    $region50: #{tpu_custom_call.1} parent=1 // pred_check
      _
    $region51: #{tpu_custom_call.1} parent=1 // pred_check_branch
      %1016 = sbr.rel (0) target = $region53
    $region52: #{tpu_custom_call.1} parent=1 // pred_region
      %1017 = dma.done [#allocation4], 128
    $region53: #{tpu_custom_call.1} parent=1 // pred_fallthru
      _
    %1018 = vsyncpa [#allocation3], 1
    %1019 = vsyncpa [#allocation6], 1
    %1020 = vsyncpa [#allocation9], 1
    %1021 = vsyncpa [#allocation4], 1

</llo_original>
